<compile_context>
chip_gen: v6e
topology: v6e:2x2x1
jax: 0.10.0
libtpu: 0.0.40
codegen_flags: <defaults>
</compile_context>

<pallas_src>
import functools
import math

import jax
import jax.numpy as jnp
from jax.experimental import pallas as pl
from jax.experimental.pallas import tpu as pltpu

MIN_LOG_STD = -20.0
MAX_LOG_STD = 2.0


def _round_up(x, m):
    return ((x + m - 1) // m) * m


def _cdiv(a, b):
    return (a + b - 1) // b


# ---------------- kernel ----------------

def actor_kernel(state_ref, w1_ref, b1_ref, w2_ref, b2_ref, wh_ref, bh_ref,
                 out_ref, *, action_dim):
    x = state_ref[...]  # bf16 (tb, S)

    # fc_1 + ReLU   (MXU matmul, f32 accumulate; bias add + relu in f32 on VPU)
    h1 = jnp.dot(x, w1_ref[...], preferred_element_type=jnp.float32) + b1_ref[...]
    h1 = jnp.maximum(h1, 0.0)

    # fc_2 + ReLU
    h2 = jnp.dot(h1.astype(w2_ref.dtype), w2_ref[...],
                 preferred_element_type=jnp.float32) + b2_ref[...]
    h2 = jnp.maximum(h2, 0.0)

    # fused heads: one matmul -> [mean | log_std | pad] in a single 128-lane slab
    head = jnp.dot(h2.astype(wh_ref.dtype), wh_ref[...],
                   preferred_element_type=jnp.float32) + bh_ref[...]

    # clamp only the log_std lanes [A, 2A); mean / padding lanes pass through.
    lane_ids = jax.lax.broadcasted_iota(jnp.int32, head.shape, dimension=1)
    is_log_std = (lane_ids >= action_dim) & (lane_ids < 2 * action_dim)
    out_ref[...] = jnp.where(is_log_std,
                             jnp.clip(head, MIN_LOG_STD, MAX_LOG_STD),
                             head)  # single full-width, lane-dense store


# ---------------- param packing ----------------

def pack_actor_params(params, weight_dtype=jnp.bfloat16):
    """Pack raw (PyTorch-layout-equivalent) params into kernel-friendly layout.

    - weights cast to `weight_dtype` (bf16 by default; f32 accumulation in-kernel)
    - hidden_dim zero-padded to a multiple of 128 (lane-dense intermediates)
    - fc_mean / fc_log_std fused into one (H_pad, out_w) weight; mean occupies
      columns [0:A), log_std columns [A:2A), out_w = round_up(2A, 128).
    - biases kept f32.
    """
    S, H = params["w1"].shape
    A = params["wm"].shape[1]
    Hp = _round_up(H, 128)
    out_w = _round_up(2 * A, 128)

    w1 = jnp.zeros((S, Hp), weight_dtype).at[:, :H].set(
        params["w1"].astype(weight_dtype))
    b1 = jnp.zeros((1, Hp), jnp.float32).at[:, :H].set(
        params["b1"].astype(jnp.float32))
    w2 = jnp.zeros((Hp, Hp), weight_dtype).at[:H, :H].set(
        params["w2"].astype(weight_dtype))
    b2 = jnp.zeros((1, Hp), jnp.float32).at[:, :H].set(
        params["b2"].astype(jnp.float32))

    wh = jnp.zeros((Hp, out_w), weight_dtype)
    wh = wh.at[:H, :A].set(params["wm"].astype(weight_dtype))
    wh = wh.at[:H, A:2 * A].set(params["ws"].astype(weight_dtype))

    bh = jnp.zeros((1, out_w), jnp.float32)
    bh = bh.at[:, :A].set(params["bm"].astype(jnp.float32))
    bh = bh.at[:, A:2 * A].set(params["bs"].astype(jnp.float32))

    return {
        "w1": w1, "b1": b1, "w2": w2, "b2": b2, "wh": wh, "bh": bh,
        "action_dim": int(A),   # static python ints (kernel layout metadata)
        "out_width": int(out_w),
    }


# ---------------- wrapper ----------------

def actor_forward(state, packed, tile_b=1024):
    """state: (B, state_dim) f32. packed: output of pack_actor_params.

    Returns (mean, log_std), both f32 of shape (B, action_dim).
    """
    B, S = state.shape
    A = packed["action_dim"]
    out_w = packed["out_width"]

    # Adaptive batch tiling: minimize padding; force >=2 grid steps for large B
    # so both v7x TensorCores get work (batch axis is "parallel").
    n_tiles = _cdiv(B, tile_b)
    if n_tiles == 1 and B >= 64:
        n_tiles = 2
    tb = _round_up(_cdiv(B, n_tiles), 16)   # mult. of 16: bf16 sublane packing
    b_pad = n_tiles * tb

    if b_pad != B:
        state = jnp.pad(state, ((0, b_pad - B), (0, 0)))
    state = state.astype(jnp.bfloat16)      # halve state DMA; MXU eats bf16 anyway
    grid = (n_tiles,)

    # weights/biases: full block, constant index_map -> VMEM-resident across steps
    def const_spec(arr):
        return pl.BlockSpec(arr.shape, lambda i: (0,) * arr.ndim)

    out = pl.pallas_call(
        functools.partial(actor_kernel, action_dim=A),
        out_shape=jax.ShapeDtypeStruct((b_pad, out_w), jnp.float32),
        grid=grid,
        in_specs=[
            pl.BlockSpec((tb, S), lambda i: (i, 0)),   # state: tiled over batch
            const_spec(packed["w1"]), const_spec(packed["b1"]),
            const_spec(packed["w2"]), const_spec(packed["b2"]),
            const_spec(packed["wh"]), const_spec(packed["bh"]),
        ],
        out_specs=pl.BlockSpec((tb, out_w), lambda i: (i, 0)),
        compiler_params=pltpu.CompilerParams(
            dimension_semantics=("parallel",)),   # shard batch tiles across TCs
    )(state, packed["w1"], packed["b1"], packed["w2"], packed["b2"],
      packed["wh"], packed["bh"])

    mean = out[:B, :A]
    log_std = out[:B, A:2 * A]
    return mean, log_std


# ---------------- init (matches PyTorch init_weights) ----------------

def xavier_uniform(key, in_dim, out_dim):
    # torch.nn.init.xavier_uniform_ (gain=1): U(-a, a), a = sqrt(6/(fan_in+fan_out))
    a = math.sqrt(6.0 / (in_dim + out_dim))
    return jax.random.uniform(key, (in_dim, out_dim), jnp.float32, -a, a)


def init_actor_params(key, state_dim, action_dim, hidden_dim):
    k1, k2, k3, k4 = jax.random.split(key, 4)
    return {
        "w1": xavier_uniform(k1, state_dim, hidden_dim),
        "b1": jnp.zeros((1, hidden_dim), jnp.float32),
        "w2": xavier_uniform(k2, hidden_dim, hidden_dim),
        "b2": jnp.zeros((1, hidden_dim), jnp.float32),
        "wm": xavier_uniform(k3, hidden_dim, action_dim),
        "bm": jnp.zeros((1, action_dim), jnp.float32),
        "ws": xavier_uniform(k4, hidden_dim, action_dim),
        "bs": jnp.zeros((1, action_dim), jnp.float32),
    }


# ---------------- references ----------------

def actor_forward_ref_packed(state, packed):
    """Reference reproducing the kernel's arithmetic (bf16 weights AND
    activations, f32 accumulation) using the same packed params."""
    A = packed["action_dim"]
    x = state.astype(jnp.bfloat16)
    h1 = jnp.dot(x, packed["w1"], preferred_element_type=jnp.float32) + packed["b1"]
    h1 = jnp.maximum(h1, 0.0)
    h2 = jnp.dot(h1.astype(jnp.bfloat16), packed["w2"],
                 preferred_element_type=jnp.float32) + packed["b2"]
    h2 = jnp.maximum(h2, 0.0)
    head = jnp.dot(h2.astype(jnp.bfloat16), packed["wh"],
                   preferred_element_type=jnp.float32) + packed["bh"]
    mean = head[:, :A]
    log_std = jnp.clip(head[:, A:2 * A], MIN_LOG_STD, MAX_LOG_STD)
    return mean, log_std


def actor_forward_ref_f32(state, p):
    """Pure f32 reference with PyTorch semantics (un-quantized weights)."""
    h1 = jnp.maximum(state @ p["w1"] + p["b1"], 0.0)
    h2 = jnp.maximum(h1 @ p["w2"] + p["b2"], 0.0)
    mean = h2 @ p["wm"] + p["bm"]
    log_std = jnp.clip(h2 @ p["ws"] + p["bs"], MIN_LOG_STD, MAX_LOG_STD)
    return mean, log_std


if __name__ == "__main__":
    batch, state_dim, action_dim, hidden_dim = 8, 16, 8, 32

    key = jax.random.PRNGKey(0)
    k_params, k_state = jax.random.split(key)
    params = init_actor_params(k_params, state_dim, action_dim, hidden_dim)
    packed = pack_actor_params(params, weight_dtype=jnp.bfloat16)
    state = jax.random.normal(k_state, (batch, state_dim), jnp.float32)

    mean, log_std = actor_forward(state, packed)
    jax.block_until_ready((mean, log_std))

    assert mean.shape == (batch, action_dim) and log_std.shape == (batch, action_dim)

    # matched-arithmetic check (same bf16 weights AND activations as the kernel;
    # tolerance covers f32 accumulation-order differences only)
    mean_r, log_std_r = actor_forward_ref_packed(state, packed)
    assert jnp.allclose(mean, mean_r, atol=1e-3, rtol=1e-3), \
        f"mean mismatch: max abs err {jnp.max(jnp.abs(mean - mean_r))}"
    assert jnp.allclose(log_std, log_std_r, atol=1e-3, rtol=1e-3), \
        f"log_std mismatch: max abs err {jnp.max(jnp.abs(log_std - log_std_r))}"

    # loose sanity check against the original f32 (PyTorch-semantics) reference
    mean_f, log_std_f = actor_forward_ref_f32(state, params)
    assert jnp.allclose(mean, mean_f, atol=5e-2, rtol=5e-2)
    assert jnp.allclose(log_std, log_std_f, atol=5e-2, rtol=5e-2)

    # TODO(synk): `sample()` (rsample/tanh/log_prob) relies on torch.distributions
    # RNG; only the deterministic forward() hot path is implemented as a kernel.
    print("KERNEL_OK")
</pallas_src>

<mosaic_0001>
module attributes {stable_mosaic.version = 11 : i64} {
  func.func @actor_kernel(%arg0: i32, %arg1: memref<16x16xbf16, #tpu.memory_space<vmem>>, %arg2: memref<16x128xbf16, #tpu.memory_space<vmem>>, %arg3: memref<1x128xf32, #tpu.memory_space<vmem>>, %arg4: memref<128x128xbf16, #tpu.memory_space<vmem>>, %arg5: memref<1x128xf32, #tpu.memory_space<vmem>>, %arg6: memref<128x128xbf16, #tpu.memory_space<vmem>>, %arg7: memref<1x128xf32, #tpu.memory_space<vmem>>, %arg8: memref<16x128xf32, #tpu.memory_space<vmem>>) attributes {dimension_semantics = [#tpu.dimension_semantics<parallel>], iteration_bounds = array<i64: 1>, scalar_prefetch = 0 : i64, scratch_operands = 0 : i64, tpu.core_type = #tpu.core_type<tc>, window_params = [{transform_indices = @transform_0, window_bounds = array<i64: 16, 16>}, {pipeline_mode = #tpu.pipeline_mode<synchronous>, transform_indices = @transform_1, window_bounds = array<i64: 16, 128>}, {pipeline_mode = #tpu.pipeline_mode<synchronous>, transform_indices = @transform_2, window_bounds = array<i64: 1, 128>}, {pipeline_mode = #tpu.pipeline_mode<synchronous>, transform_indices = @transform_3, window_bounds = array<i64: 128, 128>}, {pipeline_mode = #tpu.pipeline_mode<synchronous>, transform_indices = @transform_4, window_bounds = array<i64: 1, 128>}, {pipeline_mode = #tpu.pipeline_mode<synchronous>, transform_indices = @transform_5, window_bounds = array<i64: 128, 128>}, {pipeline_mode = #tpu.pipeline_mode<synchronous>, transform_indices = @transform_6, window_bounds = array<i64: 1, 128>}, {transform_indices = @transform_7, window_bounds = array<i64: 16, 128>}]} {
    %c0 = arith.constant 0 : index
    %c0_0 = arith.constant 0 : index
    %0 = vector.load %arg1[%c0, %c0_0] : memref<16x16xbf16, #tpu.memory_space<vmem>>, vector<16x16xbf16>
    %c0_1 = arith.constant 0 : index
    %c0_2 = arith.constant 0 : index
    %1 = vector.load %arg2[%c0_1, %c0_2] : memref<16x128xbf16, #tpu.memory_space<vmem>>, vector<16x128xbf16>
    %cst = arith.constant dense<0.000000e+00> : vector<16x128xf32>
    %2 = tpu.matmul %0, %1, %cst {dimension_numbers = #tpu.dot_dimension_numbers<[1], [0], [0], [1], [0, 0, 1, 1], [], []>} : vector<16x16xbf16>, vector<16x128xbf16>, vector<16x128xf32> -> vector<16x128xf32>
    %c0_3 = arith.constant 0 : index
    %c0_4 = arith.constant 0 : index
    %3 = vector.load %arg3[%c0_3, %c0_4] : memref<1x128xf32, #tpu.memory_space<vmem>>, vector<1x128xf32>
    %4 = vector.broadcast %3 : vector<1x128xf32> to vector<16x128xf32>
    %5 = arith.addf %2, %4 : vector<16x128xf32>
    %cst_5 = arith.constant 0.000000e+00 : f32
    %6 = vector.broadcast %cst_5 : f32 to vector<16x128xf32>
    %7 = arith.maximumf %5, %6 : vector<16x128xf32>
    %8 = arith.truncf %7 : vector<16x128xf32> to vector<16x128xbf16>
    %c0_6 = arith.constant 0 : index
    %c0_7 = arith.constant 0 : index
    %9 = vector.load %arg4[%c0_6, %c0_7] : memref<128x128xbf16, #tpu.memory_space<vmem>>, vector<128x128xbf16>
    %cst_8 = arith.constant dense<0.000000e+00> : vector<16x128xf32>
    %10 = tpu.matmul %8, %9, %cst_8 {dimension_numbers = #tpu.dot_dimension_numbers<[1], [0], [0], [1], [0, 0, 1, 1], [], []>} : vector<16x128xbf16>, vector<128x128xbf16>, vector<16x128xf32> -> vector<16x128xf32>
    %c0_9 = arith.constant 0 : index
    %c0_10 = arith.constant 0 : index
    %11 = vector.load %arg5[%c0_9, %c0_10] : memref<1x128xf32, #tpu.memory_space<vmem>>, vector<1x128xf32>
    %12 = vector.broadcast %11 : vector<1x128xf32> to vector<16x128xf32>
    %13 = arith.addf %10, %12 : vector<16x128xf32>
    %cst_11 = arith.constant 0.000000e+00 : f32
    %14 = vector.broadcast %cst_11 : f32 to vector<16x128xf32>
    %15 = arith.maximumf %13, %14 : vector<16x128xf32>
    %16 = arith.truncf %15 : vector<16x128xf32> to vector<16x128xbf16>
    %c0_12 = arith.constant 0 : index
    %c0_13 = arith.constant 0 : index
    %17 = vector.load %arg6[%c0_12, %c0_13] : memref<128x128xbf16, #tpu.memory_space<vmem>>, vector<128x128xbf16>
    %cst_14 = arith.constant dense<0.000000e+00> : vector<16x128xf32>
    %18 = tpu.matmul %16, %17, %cst_14 {dimension_numbers = #tpu.dot_dimension_numbers<[1], [0], [0], [1], [0, 0, 1, 1], [], []>} : vector<16x128xbf16>, vector<128x128xbf16>, vector<16x128xf32> -> vector<16x128xf32>
    %c0_15 = arith.constant 0 : index
    %c0_16 = arith.constant 0 : index
    %19 = vector.load %arg7[%c0_15, %c0_16] : memref<1x128xf32, #tpu.memory_space<vmem>>, vector<1x128xf32>
    %20 = vector.broadcast %19 : vector<1x128xf32> to vector<16x128xf32>
    %21 = arith.addf %18, %20 : vector<16x128xf32>
    %22 = tpu.iota {dimensions = array<i32: 1>} : vector<16x128xi32>
    %c8_i32 = arith.constant 8 : i32
    %23 = vector.broadcast %c8_i32 : i32 to vector<16x128xi32>
    %24 = arith.cmpi sge, %22, %23 : vector<16x128xi32>
    %c16_i32 = arith.constant 16 : i32
    %25 = vector.broadcast %c16_i32 : i32 to vector<16x128xi32>
    %26 = arith.cmpi slt, %22, %25 : vector<16x128xi32>
    %27 = arith.andi %24, %26 : vector<16x128xi1>
    %cst_17 = arith.constant -2.000000e+01 : f32
    %cst_18 = arith.constant 2.000000e+00 : f32
    %28 = vector.broadcast %cst_17 : f32 to vector<16x128xf32>
    %29 = arith.maximumf %28, %21 : vector<16x128xf32>
    %30 = vector.broadcast %cst_18 : f32 to vector<16x128xf32>
    %31 = arith.minimumf %30, %29 : vector<16x128xf32>
    %32 = arith.select %27, %31, %21 : vector<16x128xi1>, vector<16x128xf32>
    %c0_19 = arith.constant 0 : index
    %c0_20 = arith.constant 0 : index
    %33 = vector.load %arg8[%c0_19, %c0_20] : memref<16x128xf32, #tpu.memory_space<vmem>>, vector<16x128xf32>
    tpu.vector_store %arg8[%c0_19, %c0_20], %32 {strides = array<i32>} : memref<16x128xf32, #tpu.memory_space<vmem>>, vector<16x128xf32>,
    return
  }
  func.func @transform_0(%arg0: i32) -> (i32, i32) {
    %c0_i32 = arith.constant 0 : i32
    %c0_i32_0 = arith.constant 0 : i32
    return %arg0, %c0_i32 : i32, i32
  }
  func.func @transform_1(%arg0: i32) -> (i32, i32) {
    %c0_i32 = arith.constant 0 : i32
    %c0_i32_0 = arith.constant 0 : i32
    %c0_i32_1 = arith.constant 0 : i32
    return %c0_i32, %c0_i32_0 : i32, i32
  }
  func.func @transform_2(%arg0: i32) -> (i32, i32) {
    %c0_i32 = arith.constant 0 : i32
    %c0_i32_0 = arith.constant 0 : i32
    %c0_i32_1 = arith.constant 0 : i32
    return %c0_i32, %c0_i32_0 : i32, i32
  }
  func.func @transform_3(%arg0: i32) -> (i32, i32) {
    %c0_i32 = arith.constant 0 : i32
    %c0_i32_0 = arith.constant 0 : i32
    %c0_i32_1 = arith.constant 0 : i32
    return %c0_i32, %c0_i32_0 : i32, i32
  }
  func.func @transform_4(%arg0: i32) -> (i32, i32) {
    %c0_i32 = arith.constant 0 : i32
    %c0_i32_0 = arith.constant 0 : i32
    %c0_i32_1 = arith.constant 0 : i32
    return %c0_i32, %c0_i32_0 : i32, i32
  }
  func.func @transform_5(%arg0: i32) -> (i32, i32) {
    %c0_i32 = arith.constant 0 : i32
    %c0_i32_0 = arith.constant 0 : i32
    %c0_i32_1 = arith.constant 0 : i32
    return %c0_i32, %c0_i32_0 : i32, i32
  }
  func.func @transform_6(%arg0: i32) -> (i32, i32) {
    %c0_i32 = arith.constant 0 : i32
    %c0_i32_0 = arith.constant 0 : i32
    %c0_i32_1 = arith.constant 0 : i32
    return %c0_i32, %c0_i32_0 : i32, i32
  }
  func.func @transform_7(%arg0: i32) -> (i32, i32) {
    %c0_i32 = arith.constant 0 : i32
    %c0_i32_0 = arith.constant 0 : i32
    return %arg0, %c0_i32 : i32, i32
  }
}

</mosaic_0001>

<llo_original>
// kernel: tpu_custom_call.1
$region0: #{tpu_custom_call.1}
  #allocation0 [shape = 'u32[]', space=smem, size = 0x4, offset = 0x4, fixed_abs, tag = 'smem constant byte address 0x4 - core index']
  #allocation1 [shape = 'u32[144,128]{1,0:T(1,128)}', space=vmem, size = 0x12000, scoped, tag = 'internal scratch']
  %s0 = inlined_call_operand.hbm [shape: bf16[16,16], index: 0, kind: input, shape index: {}]
  %s1 = inlined_call_operand.hbm [shape: bf16[16,128], index: 1, kind: input, shape index: {}]
  %s2 = inlined_call_operand.vmem [shape: f32[1,128], index: 2, kind: input, shape index: {}]
  %s3 = inlined_call_operand.hbm [shape: bf16[128,128], index: 3, kind: input, shape index: {}]
  %s4 = inlined_call_operand.vmem [shape: f32[1,128], index: 4, kind: input, shape index: {}]
  %s5 = inlined_call_operand.hbm [shape: bf16[128,128], index: 5, kind: input, shape index: {}]
  %s6 = inlined_call_operand.vmem [shape: f32[1,128], index: 6, kind: input, shape index: {}]
  %s7 = inlined_call_operand.hbm [shape: f32[16,128], index: 7, kind: output, shape index: {}]
  %s8 = sld [smem:[#allocation0]]
  $region54: #{tpu_custom_call.1} parent=0
    _
  %s10 = ssub.s32 1, %s8
  %s11 = scalar_select 0, %s10, %s8
  $region1: #{tpu_custom_call.1} parent=0
    #allocation2 [shape = 'u8[4096]{0}', space=vmem, size = 0x1000, scoped, tag = 'input window, operand 0, single buffered']
    #allocation3 [shape = 's32[1]{0}', space=sflag, size = 0x4, scoped, tag = 'scoped memory for tpu_custom_call.1']
    #allocation4 [shape = 's32[1]{0}', space=sflag, size = 0x4, scoped, tag = 'scoped memory for tpu_custom_call.1']
    #allocation5 [shape = 'u8[4096]{0}', space=vmem, size = 0x1000, scoped, tag = 'input window, operand 1, single buffered']
    #allocation6 [shape = 's32[1]{0}', space=sflag, size = 0x4, scoped, tag = 'scoped memory for tpu_custom_call.1']
    #allocation7 [shape = 'u8[32768]{0}', space=vmem, size = 0x8000, scoped, tag = 'input window, operand 3, single buffered']
    #allocation8 [shape = 'u8[32768]{0}', space=vmem, size = 0x8000, scoped, tag = 'input window, operand 5, single buffered']
    #allocation9 [shape = 's32[1]{0}', space=sflag, size = 0x4, scoped, tag = 'scoped memory for tpu_custom_call.1']
    #allocation10 [shape = 'u8[8192]{0}', space=vmem, size = 0x2000, scoped, tag = 'output window, operand 0, single buffered']
    %12 = vsyncpa [#allocation3], 0
    %13 = vsyncpa [#allocation6], 0
    %14 = vsyncpa [#allocation9], 0
    %15 = vsyncpa [#allocation4], 0
    // Predicated region
    $region2: #{tpu_custom_call.1} parent=1 // pred_check
      _
    $region3: #{tpu_custom_call.1} parent=1 // pred_check_branch
      %17 = sbr.rel (0) target = $region5
    $region4: #{tpu_custom_call.1} parent=1 // pred_region
      %s19 = ssub.s32 128, 128
      %20 = vsyncadd [#allocation3], %s19
      %s21 = sshll.u32 [#allocation2], 4
      %s22 = int_to_ptr.vmem [resolvable:$true] %s21
      %27 = dma.hbm_to_vmem [thread:$0]  %s0, 128, %s22, [#allocation3], 64, 64, 4
    $region5: #{tpu_custom_call.1} parent=1 // pred_fallthru
      _
    // Predicated region
    $region6: #{tpu_custom_call.1} parent=1 // pred_check
      _
    $region7: #{tpu_custom_call.1} parent=1 // pred_check_branch
      %29 = sbr.rel (0) target = $region9
    $region8: #{tpu_custom_call.1} parent=1 // pred_region
      %s31 = ssub.s32 128, 128
      %32 = vsyncadd [#allocation6], %s31
      %s33 = sshll.u32 [#allocation5], 4
      %s34 = int_to_ptr.vmem [resolvable:$true] %s33
      %39 = dma.hbm_to_vmem [thread:$0]  %s1, 128, %s34, [#allocation6], 64, 64, 4
    $region9: #{tpu_custom_call.1} parent=1 // pred_fallthru
      _
    // Predicated region
    $region10: #{tpu_custom_call.1} parent=1 // pred_check
      _
    $region11: #{tpu_custom_call.1} parent=1 // pred_check_branch
      %41 = sbr.rel (0) target = $region13
    $region12: #{tpu_custom_call.1} parent=1 // pred_region
      _
    $region13: #{tpu_custom_call.1} parent=1 // pred_fallthru
      _
    // Predicated region
    $region14: #{tpu_custom_call.1} parent=1 // pred_check
      _
    $region15: #{tpu_custom_call.1} parent=1 // pred_check_branch
      %43 = sbr.rel (0) target = $region17
    $region16: #{tpu_custom_call.1} parent=1 // pred_region
      %s45 = ssub.s32 1024, 1024
      %46 = vsyncadd [#allocation6], %s45
      %s47 = sshll.u32 [#allocation7], 4
      %s48 = int_to_ptr.vmem [resolvable:$true] %s47
      %53 = dma.hbm_to_vmem [thread:$0]  %s3, 1024, %s48, [#allocation6], 64, 64, 4
    $region17: #{tpu_custom_call.1} parent=1 // pred_fallthru
      _
    // Predicated region
    $region18: #{tpu_custom_call.1} parent=1 // pred_check
      _
    $region19: #{tpu_custom_call.1} parent=1 // pred_check_branch
      %55 = sbr.rel (0) target = $region21
    $region20: #{tpu_custom_call.1} parent=1 // pred_region
      _
    $region21: #{tpu_custom_call.1} parent=1 // pred_fallthru
      _
    // Predicated region
    $region22: #{tpu_custom_call.1} parent=1 // pred_check
      _
    $region23: #{tpu_custom_call.1} parent=1 // pred_check_branch
      %57 = sbr.rel (0) target = $region25
    $region24: #{tpu_custom_call.1} parent=1 // pred_region
      %s59 = ssub.s32 1024, 1024
      %60 = vsyncadd [#allocation9], %s59
      %s61 = sshll.u32 [#allocation8], 4
      %s62 = int_to_ptr.vmem [resolvable:$true] %s61
      %67 = dma.hbm_to_vmem [thread:$0]  %s5, 1024, %s62, [#allocation9], 64, 64, 4
    $region25: #{tpu_custom_call.1} parent=1 // pred_fallthru
      _
    // Predicated region
    $region26: #{tpu_custom_call.1} parent=1 // pred_check
      _
    $region27: #{tpu_custom_call.1} parent=1 // pred_check_branch
      %69 = sbr.rel (0) target = $region29
    $region28: #{tpu_custom_call.1} parent=1 // pred_region
      _
    $region29: #{tpu_custom_call.1} parent=1 // pred_fallthru
      _
    // Predicated region
    $region30: #{tpu_custom_call.1} parent=1 // pred_check
      _
    $region31: #{tpu_custom_call.1} parent=1 // pred_check_branch
      %71 = sbr.rel (0) target = $region33
    $region32: #{tpu_custom_call.1} parent=1 // pred_region
      %72 = dma.done [#allocation3], 128
    $region33: #{tpu_custom_call.1} parent=1 // pred_fallthru
      _
    // Predicated region
    $region34: #{tpu_custom_call.1} parent=1 // pred_check
      _
    $region35: #{tpu_custom_call.1} parent=1 // pred_check_branch
      %74 = sbr.rel (0) target = $region37
    $region36: #{tpu_custom_call.1} parent=1 // pred_region
      %75 = dma.done [#allocation6], 128
    $region37: #{tpu_custom_call.1} parent=1 // pred_fallthru
      _
    // Predicated region
    $region38: #{tpu_custom_call.1} parent=1 // pred_check
      _
    $region39: #{tpu_custom_call.1} parent=1 // pred_check_branch
      %77 = sbr.rel (0) target = $region41
    $region40: #{tpu_custom_call.1} parent=1 // pred_region
      %78 = dma.done [#allocation6], 1024
    $region41: #{tpu_custom_call.1} parent=1 // pred_fallthru
      _
    // Predicated region
    $region42: #{tpu_custom_call.1} parent=1 // pred_check
      _
    $region43: #{tpu_custom_call.1} parent=1 // pred_check_branch
      %80 = sbr.rel (0) target = $region45
    $region44: #{tpu_custom_call.1} parent=1 // pred_region
      %81 = dma.done [#allocation9], 1024
    $region45: #{tpu_custom_call.1} parent=1 // pred_fallthru
      _
    %v83 = vld [vmem:[#allocation2] sm:$0xf]
    %v84 = vld [vmem:[#allocation2 + $0x4] sm:$0xf]
    %v85 = vld [vmem:[#allocation5] sm:$0xf]
    %v86 = vld [vmem:[#allocation5 + $0x4] sm:$0xf]
    %v87 = vld [vmem:[%s2] sm:$0x1]
    %v89 = vlaneseq
    %v90 = vshrl.u32 %v89, 7
    %v91 = vsub.s32 0, %v90
    %v92 = vrot.slane %v87, %v91
    %v96 = vunpack.c.l.b16 %v83
    %v97 = vunpack.c.l.b16 %v84
    %v98 = vpack.c.b16 %v97, %v96
    %v101 = vunpack.c.l.b16 %v85
    %v102 = vunpack.c.l.b16 %v86
    %v103 = vpack.c.b16 %v102, %v101
    %vm105 = vcmask 130048
    %v107 = vsel %vm105, %v98, 0
    %109 = vmatprep.subr.bf16.mxu0 0
    %110 = vmatpush1.bf16.msra.mxu0 0
    %111 = vmatprep.subr.bf16.mxu0 0
    %112 = vmatpush1.bf16.msra.mxu0 0
    %113 = vmatprep.subr.bf16.mxu0 0
    %114 = vmatpush1.bf16.msra.mxu0 0
    %115 = vmatprep.subr.bf16.mxu0 0
    %116 = vmatpush1.bf16.msra.mxu0 0
    %117 = vmatprep.subr.bf16.mxu0 0
    %118 = vmatpush1.bf16.msra.mxu0 0
    %119 = vmatprep.subr.bf16.mxu0 0
    %120 = vmatpush1.bf16.msra.mxu0 0
    %121 = vmatprep.subr.bf16.mxu0 0
    %122 = vmatpush1.bf16.msra.mxu0 0
    %123 = vmatprep.subr.bf16.mxu0 0
    %124 = vmatpush1.bf16.msra.mxu0 %v103
    %125 = vmatprep.subr.bf16.mxu0 0
    %126 = vmatpush2.bf16.msra.mxu0 0
    %127 = vmatprep.subr.bf16.mxu0 0
    %128 = vmatpush2.bf16.msra.mxu0 0
    %129 = vmatprep.subr.bf16.mxu0 0
    %130 = vmatpush2.bf16.msra.mxu0 0
    %131 = vmatprep.subr.bf16.mxu0 0
    %132 = vmatpush2.bf16.msra.mxu0 0
    %133 = vmatprep.subr.bf16.mxu0 0
    %134 = vmatpush2.bf16.msra.mxu0 0
    %135 = vmatprep.subr.bf16.mxu0 0
    %136 = vmatpush2.bf16.msra.mxu0 0
    %137 = vmatprep.subr.bf16.mxu0 0
    %138 = vmatpush2.bf16.msra.mxu0 0
    %139 = vmatprep.subr.bf16.mxu0 0
    %140 = vmatpush2.bf16.msra.mxu0 0
    %141 = vmatprep.mubr.bf16.mxu0 0
    %142 = vmatmul.mubr.bf16.gmra.mxu0 %v107
    %v143 = vpop.f32.mrf.mxu0
    %v144 = vadd.f32 %v92, %v143
    %v145 = vpop.f32.mrf.mxu0
    %v146 = vpop.f32.mrf.mxu0
    %v147 = vadd.f32 %v92, %v146
    %v148 = vpop.f32.mrf.mxu0
    %149 = vdwg.mxu0
    %v150 = vmax.f32 %v144, 0.0
    %v151 = vmax.f32 %v147, 0.0
    %v152 = vpack.c.bf16 %v151, %v150
    %v153 = vld [vmem:[#allocation7] sm:$0xf]
    %v154 = vld [vmem:[#allocation7 + $0x4] sm:$0xf]
    %v155 = vld [vmem:[#allocation7 + $0x8] sm:$0xf]
    %v156 = vld [vmem:[#allocation7 + $0xc] sm:$0xf]
    %v157 = vld [vmem:[#allocation7 + $0x10] sm:$0xf]
    %v158 = vld [vmem:[#allocation7 + $0x14] sm:$0xf]
    %v159 = vld [vmem:[#allocation7 + $0x18] sm:$0xf]
    %v160 = vld [vmem:[#allocation7 + $0x1c] sm:$0xf]
    %v161 = vld [vmem:[#allocation7 + $0x20] sm:$0xf]
    %v162 = vld [vmem:[#allocation7 + $0x24] sm:$0xf]
    %v163 = vld [vmem:[#allocation7 + $0x28] sm:$0xf]
    %v164 = vld [vmem:[#allocation7 + $0x2c] sm:$0xf]
    %v165 = vld [vmem:[#allocation7 + $0x30] sm:$0xf]
    %v166 = vld [vmem:[#allocation7 + $0x34] sm:$0xf]
    %v167 = vld [vmem:[#allocation7 + $0x38] sm:$0xf]
    %v168 = vld [vmem:[#allocation7 + $0x3c] sm:$0xf]
    %v169 = vld [vmem:[%s4] sm:$0x1]
    %v171 = vlaneseq
    %v172 = vshrl.u32 %v171, 7
    %v173 = vsub.s32 0, %v172
    %v174 = vrot.slane %v169, %v173
    %v192 = vunpack.c.l.b16 %v153
    %v193 = vunpack.c.l.b16 %v154
    %v194 = vunpack.c.l.b16 %v155
    %v195 = vunpack.c.l.b16 %v156
    %v196 = vunpack.c.l.b16 %v157
    %v197 = vunpack.c.l.b16 %v158
    %v198 = vunpack.c.l.b16 %v159
    %v199 = vunpack.c.l.b16 %v160
    %v200 = vunpack.c.l.b16 %v161
    %v201 = vunpack.c.l.b16 %v162
    %v202 = vunpack.c.l.b16 %v163
    %v203 = vunpack.c.l.b16 %v164
    %v204 = vunpack.c.l.b16 %v165
    %v205 = vunpack.c.l.b16 %v166
    %v206 = vunpack.c.l.b16 %v167
    %v207 = vunpack.c.l.b16 %v168
    %v208 = vpack.c.b16 %v193, %v192
    %v209 = vpack.c.b16 %v195, %v194
    %v210 = vpack.c.b16 %v197, %v196
    %v211 = vpack.c.b16 %v199, %v198
    %v212 = vpack.c.b16 %v201, %v200
    %v213 = vpack.c.b16 %v203, %v202
    %v214 = vpack.c.b16 %v205, %v204
    %v215 = vpack.c.b16 %v207, %v206
    %224 = vmatprep.subr.bf16.mxu0 0
    %225 = vmatpush1.bf16.msra.mxu0 %v215
    %226 = vmatprep.subr.bf16.mxu0 0
    %227 = vmatpush1.bf16.msra.mxu0 %v214
    %228 = vmatprep.subr.bf16.mxu0 0
    %229 = vmatpush1.bf16.msra.mxu0 %v213
    %230 = vmatprep.subr.bf16.mxu0 0
    %231 = vmatpush1.bf16.msra.mxu0 %v212
    %232 = vmatprep.subr.bf16.mxu0 0
    %233 = vmatpush1.bf16.msra.mxu0 %v211
    %234 = vmatprep.subr.bf16.mxu0 0
    %235 = vmatpush1.bf16.msra.mxu0 %v210
    %236 = vmatprep.subr.bf16.mxu0 0
    %237 = vmatpush1.bf16.msra.mxu0 %v209
    %238 = vmatprep.subr.bf16.mxu0 0
    %239 = vmatpush1.bf16.msra.mxu0 %v208
    %240 = vmatprep.subr.bf16.mxu0 0
    %241 = vmatpush2.bf16.msra.mxu0 0
    %242 = vmatprep.subr.bf16.mxu0 0
    %243 = vmatpush2.bf16.msra.mxu0 0
    %244 = vmatprep.subr.bf16.mxu0 0
    %245 = vmatpush2.bf16.msra.mxu0 0
    %246 = vmatprep.subr.bf16.mxu0 0
    %247 = vmatpush2.bf16.msra.mxu0 0
    %248 = vmatprep.subr.bf16.mxu0 0
    %249 = vmatpush2.bf16.msra.mxu0 0
    %250 = vmatprep.subr.bf16.mxu0 0
    %251 = vmatpush2.bf16.msra.mxu0 0
    %252 = vmatprep.subr.bf16.mxu0 0
    %253 = vmatpush2.bf16.msra.mxu0 0
    %254 = vmatprep.subr.bf16.mxu0 0
    %255 = vmatpush2.bf16.msra.mxu0 0
    %256 = vmatprep.mubr.bf16.mxu0 0
    %257 = vmatmul.mubr.bf16.gmra.mxu0 %v152
    %v258 = vpop.f32.mrf.mxu0
    %v259 = vadd.f32 %v174, %v258
    %v260 = vpop.f32.mrf.mxu0
    %v261 = vpop.f32.mrf.mxu0
    %v262 = vadd.f32 %v174, %v261
    %v263 = vpop.f32.mrf.mxu0
    %264 = vdwg.mxu0
    %v265 = vmax.f32 %v259, 0.0
    %v266 = vmax.f32 %v262, 0.0
    %v267 = vpack.c.bf16 %v266, %v265
    %v268 = vld [vmem:[#allocation8] sm:$0xf]
    %v269 = vld [vmem:[#allocation8 + $0x4] sm:$0xf]
    %v270 = vld [vmem:[#allocation8 + $0x8] sm:$0xf]
    %v271 = vld [vmem:[#allocation8 + $0xc] sm:$0xf]
    %v272 = vld [vmem:[#allocation8 + $0x10] sm:$0xf]
    %v273 = vld [vmem:[#allocation8 + $0x14] sm:$0xf]
    %v274 = vld [vmem:[#allocation8 + $0x18] sm:$0xf]
    %v275 = vld [vmem:[#allocation8 + $0x1c] sm:$0xf]
    %v276 = vld [vmem:[#allocation8 + $0x20] sm:$0xf]
    %v277 = vld [vmem:[#allocation8 + $0x24] sm:$0xf]
    %v278 = vld [vmem:[#allocation8 + $0x28] sm:$0xf]
    %v279 = vld [vmem:[#allocation8 + $0x2c] sm:$0xf]
    %v280 = vld [vmem:[#allocation8 + $0x30] sm:$0xf]
    %v281 = vld [vmem:[#allocation8 + $0x34] sm:$0xf]
    %v282 = vld [vmem:[#allocation8 + $0x38] sm:$0xf]
    %v283 = vld [vmem:[#allocation8 + $0x3c] sm:$0xf]
    %v284 = vld [vmem:[%s6] sm:$0x1]
    %v286 = vlaneseq
    %v287 = vshrl.u32 %v286, 7
    %v288 = vsub.s32 0, %v287
    %v289 = vrot.slane %v284, %v288
    %v307 = vunpack.c.l.b16 %v268
    %v308 = vunpack.c.l.b16 %v269
    %v309 = vunpack.c.l.b16 %v270
    %v310 = vunpack.c.l.b16 %v271
    %v311 = vunpack.c.l.b16 %v272
    %v312 = vunpack.c.l.b16 %v273
    %v313 = vunpack.c.l.b16 %v274
    %v314 = vunpack.c.l.b16 %v275
    %v315 = vunpack.c.l.b16 %v276
    %v316 = vunpack.c.l.b16 %v277
    %v317 = vunpack.c.l.b16 %v278
    %v318 = vunpack.c.l.b16 %v279
    %v319 = vunpack.c.l.b16 %v280
    %v320 = vunpack.c.l.b16 %v281
    %v321 = vunpack.c.l.b16 %v282
    %v322 = vunpack.c.l.b16 %v283
    %v323 = vpack.c.b16 %v308, %v307
    %v324 = vpack.c.b16 %v310, %v309
    %v325 = vpack.c.b16 %v312, %v311
    %v326 = vpack.c.b16 %v314, %v313
    %v327 = vpack.c.b16 %v316, %v315
    %v328 = vpack.c.b16 %v318, %v317
    %v329 = vpack.c.b16 %v320, %v319
    %v330 = vpack.c.b16 %v322, %v321
    %339 = vmatprep.subr.bf16.mxu0 0
    %340 = vmatpush1.bf16.msra.mxu0 %v330
    %341 = vmatprep.subr.bf16.mxu0 0
    %342 = vmatpush1.bf16.msra.mxu0 %v329
    %343 = vmatprep.subr.bf16.mxu0 0
    %344 = vmatpush1.bf16.msra.mxu0 %v328
    %345 = vmatprep.subr.bf16.mxu0 0
    %346 = vmatpush1.bf16.msra.mxu0 %v327
    %347 = vmatprep.subr.bf16.mxu0 0
    %348 = vmatpush1.bf16.msra.mxu0 %v326
    %349 = vmatprep.subr.bf16.mxu0 0
    %350 = vmatpush1.bf16.msra.mxu0 %v325
    %351 = vmatprep.subr.bf16.mxu0 0
    %352 = vmatpush1.bf16.msra.mxu0 %v324
    %353 = vmatprep.subr.bf16.mxu0 0
    %354 = vmatpush1.bf16.msra.mxu0 %v323
    %355 = vmatprep.subr.bf16.mxu0 0
    %356 = vmatpush2.bf16.msra.mxu0 0
    %357 = vmatprep.subr.bf16.mxu0 0
    %358 = vmatpush2.bf16.msra.mxu0 0
    %359 = vmatprep.subr.bf16.mxu0 0
    %360 = vmatpush2.bf16.msra.mxu0 0
    %361 = vmatprep.subr.bf16.mxu0 0
    %362 = vmatpush2.bf16.msra.mxu0 0
    %363 = vmatprep.subr.bf16.mxu0 0
    %364 = vmatpush2.bf16.msra.mxu0 0
    %365 = vmatprep.subr.bf16.mxu0 0
    %366 = vmatpush2.bf16.msra.mxu0 0
    %367 = vmatprep.subr.bf16.mxu0 0
    %368 = vmatpush2.bf16.msra.mxu0 0
    %369 = vmatprep.subr.bf16.mxu0 0
    %370 = vmatpush2.bf16.msra.mxu0 0
    %371 = vmatprep.mubr.bf16.mxu0 0
    %372 = vmatmul.mubr.bf16.gmra.mxu0 %v267
    %v373 = vpop.f32.mrf.mxu0
    %v374 = vadd.f32 %v289, %v373
    %v375 = vpop.f32.mrf.mxu0
    %v376 = vpop.f32.mrf.mxu0
    %v377 = vadd.f32 %v289, %v376
    %v378 = vpop.f32.mrf.mxu0
    %379 = vdwg.mxu0
    %v380 = vlaneseq
    %v381 = vand.u32 %v380, 127
    %vm382 = vcmp.ge.s32.totalorder %v381, 8
    %vm383 = vcmp.lt.s32.totalorder %v381, 16
    %vm384 = vmand %vm382, %vm383
    %v385 = vmax.f32 %v374, -20.0
    %v386 = vmax.f32 %v377, -20.0
    %v387 = vmin.f32 %v385, 2.0
    %v388 = vmin.f32 %v386, 2.0
    %v389 = vsel %vm384, %v387, %v374
    %v390 = vsel %vm384, %v388, %v377
    %391 = vst [vmem:[#allocation10] sm:$0xff] %v389
    %392 = vst [vmem:[#allocation10 + $0x8] sm:$0xff] %v390
    // Predicated region
    $region46: #{tpu_custom_call.1} parent=1 // pred_check
      _
    $region47: #{tpu_custom_call.1} parent=1 // pred_check_branch
      %394 = sbr.rel (0) target = $region49
    $region48: #{tpu_custom_call.1} parent=1 // pred_region
      %s396 = ssub.s32 256, 256
      %397 = vsyncadd [#allocation4], %s396
      %s398 = sshll.u32 [#allocation10], 4
      %s399 = int_to_ptr.vmem [resolvable:$true] %s398
      %404 = dma.vmem_to_hbm [thread:$0]  %s399, 256, %s7, [#allocation4], 128, 128, 8
    $region49: #{tpu_custom_call.1} parent=1 // pred_fallthru
      _
    // Predicated region
    $region50: #{tpu_custom_call.1} parent=1 // pred_check
      _
    $region51: #{tpu_custom_call.1} parent=1 // pred_check_branch
      %406 = sbr.rel (0) target = $region53
    $region52: #{tpu_custom_call.1} parent=1 // pred_region
      %407 = dma.done [#allocation4], 256
    $region53: #{tpu_custom_call.1} parent=1 // pred_fallthru
      _
    %408 = vsyncpa [#allocation3], 1
    %409 = vsyncpa [#allocation6], 1
    %410 = vsyncpa [#allocation9], 1
    %411 = vsyncpa [#allocation4], 1

</llo_original>
